<compile_context>
chip_gen: v5e
topology: v5e:2x2
jax: 0.10.0
libtpu: 0.0.40
codegen_flags: <defaults>
</compile_context>

<pallas_src>
import jax
import jax.numpy as jnp
from jax import lax
from jax.experimental import pallas as pl
from jax.experimental.pallas import tpu as pltpu


def _fused_conv_kernel(w_ref, b_ref, x1_ref, x2_ref, o_ref):
    # w_ref : SMEM (9,)   flattened 3x3 conv weight
    # b_ref : SMEM (1,)   conv bias
    # x1_ref, x2_ref, o_ref : VMEM (N, H, W) float32
    N, H, W = x1_ref.shape

    # Hoist scalar loads / broadcasts out of both conv applications.
    w = [w_ref[k] for k in range(9)]
    bias_full = jnp.full((N, H, W), b_ref[0], jnp.float32)

    # Zero borders for the value-level padding (built once, reused).
    zcol = jnp.zeros((N, H, 1), jnp.float32)        # pads W -> W + 2
    zrow = jnp.zeros((N, 1, W + 2), jnp.float32)    # pads H -> H + 2

    def conv3x3(x):
        # Zero-pad in registers: (N, H, W) -> (N, H+2, W+2).
        xp = jnp.concatenate([zcol, x, zcol], axis=2)
        xp = jnp.concatenate([zrow, xp, zrow], axis=1)
        # 9 shifted-window multiply-adds on the VPU.
        acc = bias_full
        for di in range(3):
            for dj in range(3):
                acc = acc + w[3 * di + dj] * xp[:, di:di + H, dj:dj + W]
        return acc

    y = conv3x3(x1_ref[...]) + x2_ref[...]   # x = conv(x1); x1 = x + x2
    o_ref[...] = conv3x3(y)                  # x1 = conv(x1)


def model_forward(x1_nchw, x2_nchw, x3_nchw, weight, bias):
    """x*_nchw: (N, 1, H, W) float32.  weight: (1,1,3,3).  bias: (1,)."""
    del x3_nchw  # x3 only appears in the unreachable part of the graph
    N, C, H, W = x1_nchw.shape
    assert C == 1

    # Free channel squeeze -> (N, H, W); no transpose.
    x1 = x1_nchw[:, 0].astype(jnp.float32)
    x2 = x2_nchw[:, 0].astype(jnp.float32)
    w_flat = weight.reshape(9).astype(jnp.float32)
    b_flat = bias.reshape(1).astype(jnp.float32)

    out_nhw = pl.pallas_call(
        _fused_conv_kernel,
        out_shape=jax.ShapeDtypeStruct((N, H, W), jnp.float32),
        in_specs=[
            pl.BlockSpec(memory_space=pltpu.MemorySpace.SMEM),  # weight
            pl.BlockSpec(memory_space=pltpu.MemorySpace.SMEM),  # bias
            pl.BlockSpec(memory_space=pltpu.MemorySpace.VMEM),  # x1
            pl.BlockSpec(memory_space=pltpu.MemorySpace.VMEM),  # x2
        ],
        out_specs=pl.BlockSpec(memory_space=pltpu.MemorySpace.VMEM),
    )(w_flat, b_flat, x1, x2)

    # (N, H, W) -> (N, 1, H, W): free reshape, no transpose.
    return out_nhw[:, None, :, :]


def _reference(x1, x2, weight, bias):
    """Pure-JAX reference: conv(conv(x1) + x2) with 3x3 / pad=1 conv."""
    def conv(x):
        y = lax.conv_general_dilated(
            x, weight, window_strides=(1, 1), padding=[(1, 1), (1, 1)],
            dimension_numbers=("NCHW", "OIHW", "NCHW"))
        return y + bias.reshape(1, 1, 1, 1)
    return conv(conv(x1) + x2)


if __name__ == "__main__":
    key = jax.random.PRNGKey(0)
    k1, k2, k3, kw, kb = jax.random.split(key, 5)

    # Inputs match the module-level tensors: torch.randn(3, 1, 8, 8)
    x1 = jax.random.normal(k1, (3, 1, 8, 8), dtype=jnp.float32)
    x2 = jax.random.normal(k2, (3, 1, 8, 8), dtype=jnp.float32)
    x3 = jax.random.normal(k3, (3, 1, 8, 8), dtype=jnp.float32)

    # Deterministic Conv2d(1, 1, 3, 3) params (PyTorch-style uniform init).
    bound = 1.0 / (9.0 ** 0.5)
    weight = jax.random.uniform(kw, (1, 1, 3, 3), jnp.float32, -bound, bound)
    bias = jax.random.uniform(kb, (1,), jnp.float32, -bound, bound)

    out = model_forward(x1, x2, x3, weight, bias)
    out = jax.block_until_ready(out)

    ref = _reference(x1, x2, weight, bias)
    assert out.shape == (3, 1, 8, 8)
    assert jnp.allclose(out, ref, atol=1e-4, rtol=1e-4)

    print("KERNEL_OK")
</pallas_src>

<mosaic_0001>
module attributes {stable_mosaic.version = 11 : i64} {
  func.func @_fused_conv_kernel(%arg0: memref<9xf32, #tpu.memory_space<smem>>, %arg1: memref<1xf32, #tpu.memory_space<smem>>, %arg2: memref<3x8x8xf32, #tpu.memory_space<vmem>>, %arg3: memref<3x8x8xf32, #tpu.memory_space<vmem>>, %arg4: memref<3x8x8xf32, #tpu.memory_space<vmem>>) attributes {dimension_semantics = [], scalar_prefetch = 0 : i64, scratch_operands = 0 : i64, tpu.core_type = #tpu.core_type<tc>} {
    %c0 = arith.constant 0 : index
    %0 = memref.load %arg0[%c0] : memref<9xf32, #tpu.memory_space<smem>>
    %c1 = arith.constant 1 : index
    %1 = memref.load %arg0[%c1] : memref<9xf32, #tpu.memory_space<smem>>
    %c2 = arith.constant 2 : index
    %2 = memref.load %arg0[%c2] : memref<9xf32, #tpu.memory_space<smem>>
    %c3 = arith.constant 3 : index
    %3 = memref.load %arg0[%c3] : memref<9xf32, #tpu.memory_space<smem>>
    %c4 = arith.constant 4 : index
    %4 = memref.load %arg0[%c4] : memref<9xf32, #tpu.memory_space<smem>>
    %c5 = arith.constant 5 : index
    %5 = memref.load %arg0[%c5] : memref<9xf32, #tpu.memory_space<smem>>
    %c6 = arith.constant 6 : index
    %6 = memref.load %arg0[%c6] : memref<9xf32, #tpu.memory_space<smem>>
    %c7 = arith.constant 7 : index
    %7 = memref.load %arg0[%c7] : memref<9xf32, #tpu.memory_space<smem>>
    %c8 = arith.constant 8 : index
    %8 = memref.load %arg0[%c8] : memref<9xf32, #tpu.memory_space<smem>>
    %c0_0 = arith.constant 0 : index
    %9 = memref.load %arg1[%c0_0] : memref<1xf32, #tpu.memory_space<smem>>
    %10 = vector.broadcast %9 : f32 to vector<3x8x8xf32>
    %cst = arith.constant 0.000000e+00 : f32
    %11 = vector.broadcast %cst : f32 to vector<3x8x1xf32>
    %cst_1 = arith.constant 0.000000e+00 : f32
    %12 = vector.broadcast %cst_1 : f32 to vector<3x1x10xf32>
    %c0_2 = arith.constant 0 : index
    %c0_3 = arith.constant 0 : index
    %c0_4 = arith.constant 0 : index
    %13 = vector.load %arg2[%c0_2, %c0_3, %c0_4] : memref<3x8x8xf32, #tpu.memory_space<vmem>>, vector<3x8x8xf32>
    %14 = tpu.concatenate %11, %13, %11 in 2 : vector<3x8x1xf32>, vector<3x8x8xf32>, vector<3x8x1xf32> -> vector<3x8x10xf32>
    %15 = tpu.concatenate %12, %14, %12 in 1 : vector<3x1x10xf32>, vector<3x8x10xf32>, vector<3x1x10xf32> -> vector<3x10x10xf32>
    %16 = vector.extract_strided_slice %15 {offsets = [0, 0, 0], sizes = [3, 8, 8], strides = [1, 1, 1]} : vector<3x10x10xf32> to vector<3x8x8xf32>
    %17 = vector.broadcast %0 : f32 to vector<3x8x8xf32>
    %18 = arith.mulf %17, %16 : vector<3x8x8xf32>
    %19 = arith.addf %10, %18 : vector<3x8x8xf32>
    %20 = vector.extract_strided_slice %15 {offsets = [0, 0, 1], sizes = [3, 8, 8], strides = [1, 1, 1]} : vector<3x10x10xf32> to vector<3x8x8xf32>
    %21 = vector.broadcast %1 : f32 to vector<3x8x8xf32>
    %22 = arith.mulf %21, %20 : vector<3x8x8xf32>
    %23 = arith.addf %19, %22 : vector<3x8x8xf32>
    %24 = vector.extract_strided_slice %15 {offsets = [0, 0, 2], sizes = [3, 8, 8], strides = [1, 1, 1]} : vector<3x10x10xf32> to vector<3x8x8xf32>
    %25 = vector.broadcast %2 : f32 to vector<3x8x8xf32>
    %26 = arith.mulf %25, %24 : vector<3x8x8xf32>
    %27 = arith.addf %23, %26 : vector<3x8x8xf32>
    %28 = vector.extract_strided_slice %15 {offsets = [0, 1, 0], sizes = [3, 8, 8], strides = [1, 1, 1]} : vector<3x10x10xf32> to vector<3x8x8xf32>
    %29 = vector.broadcast %3 : f32 to vector<3x8x8xf32>
    %30 = arith.mulf %29, %28 : vector<3x8x8xf32>
    %31 = arith.addf %27, %30 : vector<3x8x8xf32>
    %32 = vector.extract_strided_slice %15 {offsets = [0, 1, 1], sizes = [3, 8, 8], strides = [1, 1, 1]} : vector<3x10x10xf32> to vector<3x8x8xf32>
    %33 = vector.broadcast %4 : f32 to vector<3x8x8xf32>
    %34 = arith.mulf %33, %32 : vector<3x8x8xf32>
    %35 = arith.addf %31, %34 : vector<3x8x8xf32>
    %36 = vector.extract_strided_slice %15 {offsets = [0, 1, 2], sizes = [3, 8, 8], strides = [1, 1, 1]} : vector<3x10x10xf32> to vector<3x8x8xf32>
    %37 = vector.broadcast %5 : f32 to vector<3x8x8xf32>
    %38 = arith.mulf %37, %36 : vector<3x8x8xf32>
    %39 = arith.addf %35, %38 : vector<3x8x8xf32>
    %40 = vector.extract_strided_slice %15 {offsets = [0, 2, 0], sizes = [3, 8, 8], strides = [1, 1, 1]} : vector<3x10x10xf32> to vector<3x8x8xf32>
    %41 = vector.broadcast %6 : f32 to vector<3x8x8xf32>
    %42 = arith.mulf %41, %40 : vector<3x8x8xf32>
    %43 = arith.addf %39, %42 : vector<3x8x8xf32>
    %44 = vector.extract_strided_slice %15 {offsets = [0, 2, 1], sizes = [3, 8, 8], strides = [1, 1, 1]} : vector<3x10x10xf32> to vector<3x8x8xf32>
    %45 = vector.broadcast %7 : f32 to vector<3x8x8xf32>
    %46 = arith.mulf %45, %44 : vector<3x8x8xf32>
    %47 = arith.addf %43, %46 : vector<3x8x8xf32>
    %48 = vector.extract_strided_slice %15 {offsets = [0, 2, 2], sizes = [3, 8, 8], strides = [1, 1, 1]} : vector<3x10x10xf32> to vector<3x8x8xf32>
    %49 = vector.broadcast %8 : f32 to vector<3x8x8xf32>
    %50 = arith.mulf %49, %48 : vector<3x8x8xf32>
    %51 = arith.addf %47, %50 : vector<3x8x8xf32>
    %c0_5 = arith.constant 0 : index
    %c0_6 = arith.constant 0 : index
    %c0_7 = arith.constant 0 : index
    %52 = vector.load %arg3[%c0_5, %c0_6, %c0_7] : memref<3x8x8xf32, #tpu.memory_space<vmem>>, vector<3x8x8xf32>
    %53 = arith.addf %51, %52 : vector<3x8x8xf32>
    %54 = tpu.concatenate %11, %53, %11 in 2 : vector<3x8x1xf32>, vector<3x8x8xf32>, vector<3x8x1xf32> -> vector<3x8x10xf32>
    %55 = tpu.concatenate %12, %54, %12 in 1 : vector<3x1x10xf32>, vector<3x8x10xf32>, vector<3x1x10xf32> -> vector<3x10x10xf32>
    %56 = vector.extract_strided_slice %55 {offsets = [0, 0, 0], sizes = [3, 8, 8], strides = [1, 1, 1]} : vector<3x10x10xf32> to vector<3x8x8xf32>
    %57 = vector.broadcast %0 : f32 to vector<3x8x8xf32>
    %58 = arith.mulf %57, %56 : vector<3x8x8xf32>
    %59 = arith.addf %10, %58 : vector<3x8x8xf32>
    %60 = vector.extract_strided_slice %55 {offsets = [0, 0, 1], sizes = [3, 8, 8], strides = [1, 1, 1]} : vector<3x10x10xf32> to vector<3x8x8xf32>
    %61 = vector.broadcast %1 : f32 to vector<3x8x8xf32>
    %62 = arith.mulf %61, %60 : vector<3x8x8xf32>
    %63 = arith.addf %59, %62 : vector<3x8x8xf32>
    %64 = vector.extract_strided_slice %55 {offsets = [0, 0, 2], sizes = [3, 8, 8], strides = [1, 1, 1]} : vector<3x10x10xf32> to vector<3x8x8xf32>
    %65 = vector.broadcast %2 : f32 to vector<3x8x8xf32>
    %66 = arith.mulf %65, %64 : vector<3x8x8xf32>
    %67 = arith.addf %63, %66 : vector<3x8x8xf32>
    %68 = vector.extract_strided_slice %55 {offsets = [0, 1, 0], sizes = [3, 8, 8], strides = [1, 1, 1]} : vector<3x10x10xf32> to vector<3x8x8xf32>
    %69 = vector.broadcast %3 : f32 to vector<3x8x8xf32>
    %70 = arith.mulf %69, %68 : vector<3x8x8xf32>
    %71 = arith.addf %67, %70 : vector<3x8x8xf32>
    %72 = vector.extract_strided_slice %55 {offsets = [0, 1, 1], sizes = [3, 8, 8], strides = [1, 1, 1]} : vector<3x10x10xf32> to vector<3x8x8xf32>
    %73 = vector.broadcast %4 : f32 to vector<3x8x8xf32>
    %74 = arith.mulf %73, %72 : vector<3x8x8xf32>
    %75 = arith.addf %71, %74 : vector<3x8x8xf32>
    %76 = vector.extract_strided_slice %55 {offsets = [0, 1, 2], sizes = [3, 8, 8], strides = [1, 1, 1]} : vector<3x10x10xf32> to vector<3x8x8xf32>
    %77 = vector.broadcast %5 : f32 to vector<3x8x8xf32>
    %78 = arith.mulf %77, %76 : vector<3x8x8xf32>
    %79 = arith.addf %75, %78 : vector<3x8x8xf32>
    %80 = vector.extract_strided_slice %55 {offsets = [0, 2, 0], sizes = [3, 8, 8], strides = [1, 1, 1]} : vector<3x10x10xf32> to vector<3x8x8xf32>
    %81 = vector.broadcast %6 : f32 to vector<3x8x8xf32>
    %82 = arith.mulf %81, %80 : vector<3x8x8xf32>
    %83 = arith.addf %79, %82 : vector<3x8x8xf32>
    %84 = vector.extract_strided_slice %55 {offsets = [0, 2, 1], sizes = [3, 8, 8], strides = [1, 1, 1]} : vector<3x10x10xf32> to vector<3x8x8xf32>
    %85 = vector.broadcast %7 : f32 to vector<3x8x8xf32>
    %86 = arith.mulf %85, %84 : vector<3x8x8xf32>
    %87 = arith.addf %83, %86 : vector<3x8x8xf32>
    %88 = vector.extract_strided_slice %55 {offsets = [0, 2, 2], sizes = [3, 8, 8], strides = [1, 1, 1]} : vector<3x10x10xf32> to vector<3x8x8xf32>
    %89 = vector.broadcast %8 : f32 to vector<3x8x8xf32>
    %90 = arith.mulf %89, %88 : vector<3x8x8xf32>
    %91 = arith.addf %87, %90 : vector<3x8x8xf32>
    %c0_8 = arith.constant 0 : index
    %c0_9 = arith.constant 0 : index
    %c0_10 = arith.constant 0 : index
    %92 = vector.load %arg4[%c0_8, %c0_9, %c0_10] : memref<3x8x8xf32, #tpu.memory_space<vmem>>, vector<3x8x8xf32>
    tpu.vector_store %arg4[%c0_8, %c0_9, %c0_10], %91 {strides = array<i32>} : memref<3x8x8xf32, #tpu.memory_space<vmem>>, vector<3x8x8xf32>,
    return
  }
}

</mosaic_0001>

<llo_original>
// kernel: tpu_custom_call.1
$region0: #{tpu_custom_call.1}
  #allocation0 [shape = 'u32[]', space=smem, size = 0x4, offset = 0x4, fixed_abs, tag = 'smem constant byte address 0x4 - core index']
  #allocation1 [shape = 'u32[72,128]{1,0:T(1,128)}', space=vmem, size = 0x9000, scoped, tag = 'internal scratch']
  #allocation2 [shape = 'f32[1]{0:T(128)S(6)}', space=smem, size = 0x200, scoped, tag = 'scoped memory for tpu_custom_call.1']
  %s0 = inlined_call_operand.vmem [shape: f32[9], index: 0, kind: input, shape index: {}]
  %s1 = inlined_call_operand.<no memory space> [shape: f32[1], index: 1, kind: input, shape index: {}]
  %s2 = inlined_call_operand.hbm [shape: f32[3,8,8], index: 2, kind: input, shape index: {}]
  %s3 = inlined_call_operand.hbm [shape: f32[3,8,8], index: 3, kind: input, shape index: {}]
  %s4 = inlined_call_operand.hbm [shape: f32[3,8,8], index: 4, kind: output, shape index: {}]
  %s5 = sld [smem:[#allocation0]]
  $region38: #{tpu_custom_call.1} parent=0
    _
  %s7 = ssub.s32 1, %s5
  %s8 = scalar_select 0, %s7, %s5
  %9 = sst [smem:[#allocation2]] %s1
  $region1: #{tpu_custom_call.1} parent=0
    #allocation3 [shape = 'u8[512]{0}', space=smem, size = 0x200, scoped, tag = 'input window, operand 0, single buffered']
    #allocation4 [shape = 's32[1]{0}', space=sflag, size = 0x4, scoped, tag = 'scoped memory for tpu_custom_call.1']
    #allocation5 [shape = 's32[1]{0}', space=sflag, size = 0x4, scoped, tag = 'scoped memory for tpu_custom_call.1']
    #allocation6 [shape = 's32[1]{0}', space=sflag, size = 0x4, scoped, tag = 'scoped memory for tpu_custom_call.1']
    #allocation7 [shape = 'u8[12288]{0}', space=vmem, size = 0x3000, scoped, tag = 'input window, operand 2, single buffered']
    #allocation8 [shape = 'u8[12288]{0}', space=vmem, size = 0x3000, scoped, tag = 'input window, operand 3, single buffered']
    #allocation9 [shape = 's32[1]{0}', space=sflag, size = 0x4, scoped, tag = 'scoped memory for tpu_custom_call.1']
    #allocation10 [shape = 'u8[12288]{0}', space=vmem, size = 0x3000, scoped, tag = 'output window, operand 0, single buffered']
    %10 = vsyncpa [#allocation6], 0
    %11 = vsyncpa [#allocation4], 0
    %12 = vsyncpa [#allocation9], 0
    %13 = vsyncpa [#allocation5], 0
    // Predicated region
    $region2: #{tpu_custom_call.1} parent=1 // pred_check
      _
    $region3: #{tpu_custom_call.1} parent=1 // pred_check_branch
      %15 = sbr.rel (0) target = $region5
    $region4: #{tpu_custom_call.1} parent=1 // pred_region
      %17 = vsyncadd [#allocation6], 0
      %s19 = sshll.u32 %s0, 4
      %s20 = int_to_ptr.vmem [resolvable:$true] %s19
      %22 = dma.vmem_to_smem %s20, 16, [#allocation3], [#allocation6]
    $region5: #{tpu_custom_call.1} parent=1 // pred_fallthru
      _
    // Predicated region
    $region6: #{tpu_custom_call.1} parent=1 // pred_check
      _
    $region7: #{tpu_custom_call.1} parent=1 // pred_check_branch
      %24 = sbr.rel (0) target = $region9
    $region8: #{tpu_custom_call.1} parent=1 // pred_region
      _
    $region9: #{tpu_custom_call.1} parent=1 // pred_fallthru
      _
    // Predicated region
    $region10: #{tpu_custom_call.1} parent=1 // pred_check
      _
    $region11: #{tpu_custom_call.1} parent=1 // pred_check_branch
      %26 = sbr.rel (0) target = $region13
    $region12: #{tpu_custom_call.1} parent=1 // pred_region
      %28 = vsyncadd [#allocation4], 0
      %s29 = sshll.u32 %s2, 4
      %s30 = int_to_ptr.hbm [resolvable:$true] %s29
      %s31 = sshll.u32 [#allocation7], 4
      %s32 = int_to_ptr.vmem [resolvable:$true] %s31
      %37 = dma.hbm_to_vmem [thread:$0]  %s30, 384, %s32, [#allocation4], 128, 128, 8
    $region13: #{tpu_custom_call.1} parent=1 // pred_fallthru
      _
    // Predicated region
    $region14: #{tpu_custom_call.1} parent=1 // pred_check
      _
    $region15: #{tpu_custom_call.1} parent=1 // pred_check_branch
      %39 = sbr.rel (0) target = $region17
    $region16: #{tpu_custom_call.1} parent=1 // pred_region
      %41 = vsyncadd [#allocation9], 0
      %s42 = sshll.u32 %s3, 4
      %s43 = int_to_ptr.hbm [resolvable:$true] %s42
      %s44 = sshll.u32 [#allocation8], 4
      %s45 = int_to_ptr.vmem [resolvable:$true] %s44
      %50 = dma.hbm_to_vmem [thread:$0]  %s43, 384, %s45, [#allocation9], 128, 128, 8
    $region17: #{tpu_custom_call.1} parent=1 // pred_fallthru
      _
    // Predicated region
    $region18: #{tpu_custom_call.1} parent=1 // pred_check
      _
    $region19: #{tpu_custom_call.1} parent=1 // pred_check_branch
      %52 = sbr.rel (0) target = $region21
    $region20: #{tpu_custom_call.1} parent=1 // pred_region
      %54 = dma.done [#allocation6], 16
    $region21: #{tpu_custom_call.1} parent=1 // pred_fallthru
      _
    // Predicated region
    $region22: #{tpu_custom_call.1} parent=1 // pred_check
      _
    $region23: #{tpu_custom_call.1} parent=1 // pred_check_branch
      %56 = sbr.rel (0) target = $region25
    $region24: #{tpu_custom_call.1} parent=1 // pred_region
      %58 = dma.done [#allocation4], 384
    $region25: #{tpu_custom_call.1} parent=1 // pred_fallthru
      _
    // Predicated region
    $region26: #{tpu_custom_call.1} parent=1 // pred_check
      _
    $region27: #{tpu_custom_call.1} parent=1 // pred_check_branch
      %60 = sbr.rel (0) target = $region29
    $region28: #{tpu_custom_call.1} parent=1 // pred_region
      %62 = dma.done [#allocation9], 384
    $region29: #{tpu_custom_call.1} parent=1 // pred_fallthru
      _
    %63 = sfence
    %s64 = sld [smem:[#allocation3]]
    %s65 = sld [smem:[#allocation3 + $0x1]]
    %s66 = sld [smem:[#allocation3 + $0x2]]
    %s67 = sld [smem:[#allocation3 + $0x3]]
    %s68 = sld [smem:[#allocation3 + $0x4]]
    %s69 = sld [smem:[#allocation3 + $0x5]]
    %s70 = sld [smem:[#allocation3 + $0x6]]
    %s71 = sld [smem:[#allocation3 + $0x7]]
    %s72 = sld [smem:[#allocation3 + $0x8]]
    %s73 = sld [smem:[#allocation2]]
    %v74 = vstv %s73
    %v75 = vld [vmem:[#allocation7] sm:$0xff]
    %v76 = vld [vmem:[#allocation7 + $0x8] sm:$0xff]
    %v77 = vld [vmem:[#allocation7 + $0x10] sm:$0xff]
    %81 = vrot.lane.b32.xlu0 %v75, 1
    %v82 = vpop.permute.xlu0 %81
    %83 = vrot.lane.b32.xlu0 %v76, 1
    %v84 = vpop.permute.xlu0 %83
    %85 = vrot.lane.b32.xlu0 %v77, 1
    %v86 = vpop.permute.xlu0 %85
    %vm90 = vcmask 7168
    %v91 = vsel %vm90, 0.0, %v82
    %v92 = vsel %vm90, 0.0, %v84
    %v93 = vsel %vm90, 0.0, %v86
    %vm94 = vcmask 72704
    %v95 = vsel %vm94, %v91, 0.0
    %v96 = vsel %vm94, %v92, 0.0
    %v97 = vsel %vm94, %v93, 0.0
    %v101 = vrot.slane %v95, 7
    %v102 = vrot.slane %v96, 7
    %v103 = vrot.slane %v97, 7
    %vm107 = vcmask 1040384
    %v108 = vsel %vm107, 0.0, %v101
    %v109 = vsel %vm107, 0.0, %v102
    %v110 = vsel %vm107, 0.0, %v103
    %v111 = vsel %vm107, %v101, 0.0
    %v112 = vsel %vm107, %v102, 0.0
    %v113 = vsel %vm107, %v103, 0.0
    %v114 = vstv %s64
    %v115 = vmul.f32 %v114, %v108
    %v116 = vmul.f32 %v114, %v109
    %v117 = vmul.f32 %v114, %v110
    %v118 = vadd.f32 %v74, %v115
    %v119 = vadd.f32 %v74, %v116
    %v120 = vadd.f32 %v74, %v117
    %v121 = vstv %s65
    %v122 = vmul.f32 %v121, %v108
    %v123 = vmul.f32 %v121, %v109
    %v124 = vmul.f32 %v121, %v110
    %128 = vrot.lane.b32.xlu0 %v122, 127
    %v129 = vpop.permute.xlu0 %128
    %130 = vrot.lane.b32.xlu0 %v123, 127
    %v131 = vpop.permute.xlu0 %130
    %132 = vrot.lane.b32.xlu0 %v124, 127
    %v133 = vpop.permute.xlu0 %132
    %v137 = vadd.f32 %v118, %v129
    %v138 = vadd.f32 %v119, %v131
    %v139 = vadd.f32 %v120, %v133
    %v140 = vstv %s66
    %v141 = vmul.f32 %v140, %v108
    %v142 = vmul.f32 %v140, %v109
    %v143 = vmul.f32 %v140, %v110
    %147 = vrot.lane.b32.xlu0 %v141, 126
    %v148 = vpop.permute.xlu0 %147
    %149 = vrot.lane.b32.xlu0 %v142, 126
    %v150 = vpop.permute.xlu0 %149
    %151 = vrot.lane.b32.xlu0 %v143, 126
    %v152 = vpop.permute.xlu0 %151
    %v156 = vadd.f32 %v137, %v148
    %v157 = vadd.f32 %v138, %v150
    %v158 = vadd.f32 %v139, %v152
    %v159 = vstv %s67
    %v160 = vmul.f32 %v159, %v108
    %v161 = vmul.f32 %v159, %v111
    %v162 = vmul.f32 %v159, %v109
    %v163 = vmul.f32 %v159, %v112
    %v164 = vmul.f32 %v159, %v110
    %v165 = vmul.f32 %v159, %v113
    %vm172 = vcmask 1046528
    %v173 = vrot.slane %v160, 1
    %v174 = vrot.slane %v161, 1
    %v175 = vsel %vm172, %v173, %v174
    %v176 = vrot.slane %v162, 1
    %v177 = vrot.slane %v163, 1
    %v178 = vsel %vm172, %v176, %v177
    %v179 = vrot.slane %v164, 1
    %v180 = vrot.slane %v165, 1
    %v181 = vsel %vm172, %v179, %v180
    %v185 = vadd.f32 %v156, %v175
    %v186 = vadd.f32 %v157, %v178
    %v187 = vadd.f32 %v158, %v181
    %v188 = vstv %s68
    %v189 = vmul.f32 %v188, %v108
    %v190 = vmul.f32 %v188, %v111
    %v191 = vmul.f32 %v188, %v109
    %v192 = vmul.f32 %v188, %v112
    %v193 = vmul.f32 %v188, %v110
    %v194 = vmul.f32 %v188, %v113
    %v201 = vrot.slane %v189, 1
    %v202 = vrot.slane %v190, 1
    %v203 = vsel %vm172, %v201, %v202
    %v204 = vrot.slane %v191, 1
    %v205 = vrot.slane %v192, 1
    %v206 = vsel %vm172, %v204, %v205
    %v207 = vrot.slane %v193, 1
    %v208 = vrot.slane %v194, 1
    %v209 = vsel %vm172, %v207, %v208
    %210 = vrot.lane.b32.xlu0 %v203, 127
    %v211 = vpop.permute.xlu0 %210
    %212 = vrot.lane.b32.xlu0 %v206, 127
    %v213 = vpop.permute.xlu0 %212
    %214 = vrot.lane.b32.xlu0 %v209, 127
    %v215 = vpop.permute.xlu0 %214
    %v219 = vadd.f32 %v185, %v211
    %v220 = vadd.f32 %v186, %v213
    %v221 = vadd.f32 %v187, %v215
    %v222 = vstv %s69
    %v223 = vmul.f32 %v222, %v108
    %v224 = vmul.f32 %v222, %v111
    %v225 = vmul.f32 %v222, %v109
    %v226 = vmul.f32 %v222, %v112
    %v227 = vmul.f32 %v222, %v110
    %v228 = vmul.f32 %v222, %v113
    %v235 = vrot.slane %v223, 1
    %v236 = vrot.slane %v224, 1
    %v237 = vsel %vm172, %v235, %v236
    %v238 = vrot.slane %v225, 1
    %v239 = vrot.slane %v226, 1
    %v240 = vsel %vm172, %v238, %v239
    %v241 = vrot.slane %v227, 1
    %v242 = vrot.slane %v228, 1
    %v243 = vsel %vm172, %v241, %v242
    %244 = vrot.lane.b32.xlu0 %v237, 126
    %v245 = vpop.permute.xlu0 %244
    %246 = vrot.lane.b32.xlu0 %v240, 126
    %v247 = vpop.permute.xlu0 %246
    %248 = vrot.lane.b32.xlu0 %v243, 126
    %v249 = vpop.permute.xlu0 %248
    %v253 = vadd.f32 %v219, %v245
    %v254 = vadd.f32 %v220, %v247
    %v255 = vadd.f32 %v221, %v249
    %v256 = vstv %s70
    %v257 = vmul.f32 %v256, %v108
    %v258 = vmul.f32 %v256, %v111
    %v259 = vmul.f32 %v256, %v109
    %v260 = vmul.f32 %v256, %v112
    %v261 = vmul.f32 %v256, %v110
    %v262 = vmul.f32 %v256, %v113
    %vm269 = vcmask 1045504
    %v270 = vrot.slane %v257, 2
    %v271 = vrot.slane %v258, 2
    %v272 = vsel %vm269, %v270, %v271
    %v273 = vrot.slane %v259, 2
    %v274 = vrot.slane %v260, 2
    %v275 = vsel %vm269, %v273, %v274
    %v276 = vrot.slane %v261, 2
    %v277 = vrot.slane %v262, 2
    %v278 = vsel %vm269, %v276, %v277
    %v282 = vadd.f32 %v253, %v272
    %v283 = vadd.f32 %v254, %v275
    %v284 = vadd.f32 %v255, %v278
    %v285 = vstv %s71
    %v286 = vmul.f32 %v285, %v108
    %v287 = vmul.f32 %v285, %v111
    %v288 = vmul.f32 %v285, %v109
    %v289 = vmul.f32 %v285, %v112
    %v290 = vmul.f32 %v285, %v110
    %v291 = vmul.f32 %v285, %v113
    %v298 = vrot.slane %v286, 2
    %v299 = vrot.slane %v287, 2
    %v300 = vsel %vm269, %v298, %v299
    %v301 = vrot.slane %v288, 2
    %v302 = vrot.slane %v289, 2
    %v303 = vsel %vm269, %v301, %v302
    %v304 = vrot.slane %v290, 2
    %v305 = vrot.slane %v291, 2
    %v306 = vsel %vm269, %v304, %v305
    %307 = vrot.lane.b32.xlu0 %v300, 127
    %v308 = vpop.permute.xlu0 %307
    %309 = vrot.lane.b32.xlu0 %v303, 127
    %v310 = vpop.permute.xlu0 %309
    %311 = vrot.lane.b32.xlu0 %v306, 127
    %v312 = vpop.permute.xlu0 %311
    %v316 = vadd.f32 %v282, %v308
    %v317 = vadd.f32 %v283, %v310
    %v318 = vadd.f32 %v284, %v312
    %v319 = vstv %s72
    %v320 = vmul.f32 %v319, %v108
    %v321 = vmul.f32 %v319, %v111
    %v322 = vmul.f32 %v319, %v109
    %v323 = vmul.f32 %v319, %v112
    %v324 = vmul.f32 %v319, %v110
    %v325 = vmul.f32 %v319, %v113
    %v332 = vrot.slane %v320, 2
    %v333 = vrot.slane %v321, 2
    %v334 = vsel %vm269, %v332, %v333
    %v335 = vrot.slane %v322, 2
    %v336 = vrot.slane %v323, 2
    %v337 = vsel %vm269, %v335, %v336
    %v338 = vrot.slane %v324, 2
    %v339 = vrot.slane %v325, 2
    %v340 = vsel %vm269, %v338, %v339
    %341 = vrot.lane.b32.xlu0 %v334, 126
    %v342 = vpop.permute.xlu0 %341
    %343 = vrot.lane.b32.xlu0 %v337, 126
    %v344 = vpop.permute.xlu0 %343
    %345 = vrot.lane.b32.xlu0 %v340, 126
    %v346 = vpop.permute.xlu0 %345
    %v350 = vadd.f32 %v316, %v342
    %v351 = vadd.f32 %v317, %v344
    %v352 = vadd.f32 %v318, %v346
    %v353 = vld [vmem:[#allocation8] sm:$0xff]
    %v354 = vld [vmem:[#allocation8 + $0x8] sm:$0xff]
    %v355 = vld [vmem:[#allocation8 + $0x10] sm:$0xff]
    %v356 = vadd.f32 %v350, %v353
    %v357 = vadd.f32 %v351, %v354
    %v358 = vadd.f32 %v352, %v355
    %362 = vrot.lane.b32.xlu0 %v356, 1
    %v363 = vpop.permute.xlu0 %362
    %364 = vrot.lane.b32.xlu0 %v357, 1
    %v365 = vpop.permute.xlu0 %364
    %366 = vrot.lane.b32.xlu0 %v358, 1
    %v367 = vpop.permute.xlu0 %366
    %v371 = vsel %vm90, 0.0, %v363
    %v372 = vsel %vm90, 0.0, %v365
    %v373 = vsel %vm90, 0.0, %v367
    %v374 = vsel %vm94, %v371, 0.0
    %v375 = vsel %vm94, %v372, 0.0
    %v376 = vsel %vm94, %v373, 0.0
    %v380 = vrot.slane %v374, 7
    %v381 = vrot.slane %v375, 7
    %v382 = vrot.slane %v376, 7
    %v386 = vsel %vm107, 0.0, %v380
    %v387 = vsel %vm107, 0.0, %v381
    %v388 = vsel %vm107, 0.0, %v382
    %v389 = vsel %vm107, %v380, 0.0
    %v390 = vsel %vm107, %v381, 0.0
    %v391 = vsel %vm107, %v382, 0.0
    %v392 = vmul.f32 %v114, %v386
    %v393 = vmul.f32 %v114, %v387
    %v394 = vmul.f32 %v114, %v388
    %v395 = vadd.f32 %v74, %v392
    %v396 = vadd.f32 %v74, %v393
    %v397 = vadd.f32 %v74, %v394
    %v398 = vmul.f32 %v121, %v386
    %v399 = vmul.f32 %v121, %v387
    %v400 = vmul.f32 %v121, %v388
    %404 = vrot.lane.b32.xlu0 %v398, 127
    %v405 = vpop.permute.xlu0 %404
    %406 = vrot.lane.b32.xlu0 %v399, 127
    %v407 = vpop.permute.xlu0 %406
    %408 = vrot.lane.b32.xlu0 %v400, 127
    %v409 = vpop.permute.xlu0 %408
    %v413 = vadd.f32 %v395, %v405
    %v414 = vadd.f32 %v396, %v407
    %v415 = vadd.f32 %v397, %v409
    %v416 = vmul.f32 %v140, %v386
    %v417 = vmul.f32 %v140, %v387
    %v418 = vmul.f32 %v140, %v388
    %422 = vrot.lane.b32.xlu0 %v416, 126
    %v423 = vpop.permute.xlu0 %422
    %424 = vrot.lane.b32.xlu0 %v417, 126
    %v425 = vpop.permute.xlu0 %424
    %426 = vrot.lane.b32.xlu0 %v418, 126
    %v427 = vpop.permute.xlu0 %426
    %v431 = vadd.f32 %v413, %v423
    %v432 = vadd.f32 %v414, %v425
    %v433 = vadd.f32 %v415, %v427
    %v434 = vmul.f32 %v159, %v386
    %v435 = vmul.f32 %v159, %v389
    %v436 = vmul.f32 %v159, %v387
    %v437 = vmul.f32 %v159, %v390
    %v438 = vmul.f32 %v159, %v388
    %v439 = vmul.f32 %v159, %v391
    %v446 = vrot.slane %v434, 1
    %v447 = vrot.slane %v435, 1
    %v448 = vsel %vm172, %v446, %v447
    %v449 = vrot.slane %v436, 1
    %v450 = vrot.slane %v437, 1
    %v451 = vsel %vm172, %v449, %v450
    %v452 = vrot.slane %v438, 1
    %v453 = vrot.slane %v439, 1
    %v454 = vsel %vm172, %v452, %v453
    %v458 = vadd.f32 %v431, %v448
    %v459 = vadd.f32 %v432, %v451
    %v460 = vadd.f32 %v433, %v454
    %v461 = vmul.f32 %v188, %v386
    %v462 = vmul.f32 %v188, %v389
    %v463 = vmul.f32 %v188, %v387
    %v464 = vmul.f32 %v188, %v390
    %v465 = vmul.f32 %v188, %v388
    %v466 = vmul.f32 %v188, %v391
    %v473 = vrot.slane %v461, 1
    %v474 = vrot.slane %v462, 1
    %v475 = vsel %vm172, %v473, %v474
    %v476 = vrot.slane %v463, 1
    %v477 = vrot.slane %v464, 1
    %v478 = vsel %vm172, %v476, %v477
    %v479 = vrot.slane %v465, 1
    %v480 = vrot.slane %v466, 1
    %v481 = vsel %vm172, %v479, %v480
    %482 = vrot.lane.b32.xlu0 %v475, 127
    %v483 = vpop.permute.xlu0 %482
    %484 = vrot.lane.b32.xlu0 %v478, 127
    %v485 = vpop.permute.xlu0 %484
    %486 = vrot.lane.b32.xlu0 %v481, 127
    %v487 = vpop.permute.xlu0 %486
    %v491 = vadd.f32 %v458, %v483
    %v492 = vadd.f32 %v459, %v485
    %v493 = vadd.f32 %v460, %v487
    %v494 = vmul.f32 %v222, %v386
    %v495 = vmul.f32 %v222, %v389
    %v496 = vmul.f32 %v222, %v387
    %v497 = vmul.f32 %v222, %v390
    %v498 = vmul.f32 %v222, %v388
    %v499 = vmul.f32 %v222, %v391
    %v506 = vrot.slane %v494, 1
    %v507 = vrot.slane %v495, 1
    %v508 = vsel %vm172, %v506, %v507
    %v509 = vrot.slane %v496, 1
    %v510 = vrot.slane %v497, 1
    %v511 = vsel %vm172, %v509, %v510
    %v512 = vrot.slane %v498, 1
    %v513 = vrot.slane %v499, 1
    %v514 = vsel %vm172, %v512, %v513
    %515 = vrot.lane.b32.xlu0 %v508, 126
    %v516 = vpop.permute.xlu0 %515
    %517 = vrot.lane.b32.xlu0 %v511, 126
    %v518 = vpop.permute.xlu0 %517
    %519 = vrot.lane.b32.xlu0 %v514, 126
    %v520 = vpop.permute.xlu0 %519
    %v524 = vadd.f32 %v491, %v516
    %v525 = vadd.f32 %v492, %v518
    %v526 = vadd.f32 %v493, %v520
    %v527 = vmul.f32 %v256, %v386
    %v528 = vmul.f32 %v256, %v389
    %v529 = vmul.f32 %v256, %v387
    %v530 = vmul.f32 %v256, %v390
    %v531 = vmul.f32 %v256, %v388
    %v532 = vmul.f32 %v256, %v391
    %v539 = vrot.slane %v527, 2
    %v540 = vrot.slane %v528, 2
    %v541 = vsel %vm269, %v539, %v540
    %v542 = vrot.slane %v529, 2
    %v543 = vrot.slane %v530, 2
    %v544 = vsel %vm269, %v542, %v543
    %v545 = vrot.slane %v531, 2
    %v546 = vrot.slane %v532, 2
    %v547 = vsel %vm269, %v545, %v546
    %v551 = vadd.f32 %v524, %v541
    %v552 = vadd.f32 %v525, %v544
    %v553 = vadd.f32 %v526, %v547
    %v554 = vmul.f32 %v285, %v386
    %v555 = vmul.f32 %v285, %v389
    %v556 = vmul.f32 %v285, %v387
    %v557 = vmul.f32 %v285, %v390
    %v558 = vmul.f32 %v285, %v388
    %v559 = vmul.f32 %v285, %v391
    %v566 = vrot.slane %v554, 2
    %v567 = vrot.slane %v555, 2
    %v568 = vsel %vm269, %v566, %v567
    %v569 = vrot.slane %v556, 2
    %v570 = vrot.slane %v557, 2
    %v571 = vsel %vm269, %v569, %v570
    %v572 = vrot.slane %v558, 2
    %v573 = vrot.slane %v559, 2
    %v574 = vsel %vm269, %v572, %v573
    %575 = vrot.lane.b32.xlu0 %v568, 127
    %v576 = vpop.permute.xlu0 %575
    %577 = vrot.lane.b32.xlu0 %v571, 127
    %v578 = vpop.permute.xlu0 %577
    %579 = vrot.lane.b32.xlu0 %v574, 127
    %v580 = vpop.permute.xlu0 %579
    %v584 = vadd.f32 %v551, %v576
    %v585 = vadd.f32 %v552, %v578
    %v586 = vadd.f32 %v553, %v580
    %v587 = vmul.f32 %v319, %v386
    %v588 = vmul.f32 %v319, %v389
    %v589 = vmul.f32 %v319, %v387
    %v590 = vmul.f32 %v319, %v390
    %v591 = vmul.f32 %v319, %v388
    %v592 = vmul.f32 %v319, %v391
    %v599 = vrot.slane %v587, 2
    %v600 = vrot.slane %v588, 2
    %v601 = vsel %vm269, %v599, %v600
    %v602 = vrot.slane %v589, 2
    %v603 = vrot.slane %v590, 2
    %v604 = vsel %vm269, %v602, %v603
    %v605 = vrot.slane %v591, 2
    %v606 = vrot.slane %v592, 2
    %v607 = vsel %vm269, %v605, %v606
    %608 = vrot.lane.b32.xlu0 %v601, 126
    %v609 = vpop.permute.xlu0 %608
    %610 = vrot.lane.b32.xlu0 %v604, 126
    %v611 = vpop.permute.xlu0 %610
    %612 = vrot.lane.b32.xlu0 %v607, 126
    %v613 = vpop.permute.xlu0 %612
    %v617 = vadd.f32 %v584, %v609
    %v618 = vadd.f32 %v585, %v611
    %v619 = vadd.f32 %v586, %v613
    %vm620 = vcmask 64512
    %621 = vst.msk [vmem:[#allocation10] sm:$0xff] %vm620, %v617
    %622 = vst.msk [vmem:[#allocation10 + $0x8] sm:$0xff] %vm620, %v618
    %623 = vst.msk [vmem:[#allocation10 + $0x10] sm:$0xff] %vm620, %v619
    // Predicated region
    $region30: #{tpu_custom_call.1} parent=1 // pred_check
      _
    $region31: #{tpu_custom_call.1} parent=1 // pred_check_branch
      %625 = sbr.rel (0) target = $region33
    $region32: #{tpu_custom_call.1} parent=1 // pred_region
      %627 = vsyncadd [#allocation5], 0
      %s628 = sshll.u32 [#allocation10], 4
      %s629 = int_to_ptr.vmem [resolvable:$true] %s628
      %s630 = sshll.u32 %s4, 4
      %s631 = int_to_ptr.hbm [resolvable:$true] %s630
      %636 = dma.vmem_to_hbm [thread:$0]  %s629, 384, %s631, [#allocation5], 128, 128, 8
    $region33: #{tpu_custom_call.1} parent=1 // pred_fallthru
      _
    // Predicated region
    $region34: #{tpu_custom_call.1} parent=1 // pred_check
      _
    $region35: #{tpu_custom_call.1} parent=1 // pred_check_branch
      %638 = sbr.rel (0) target = $region37
    $region36: #{tpu_custom_call.1} parent=1 // pred_region
      %640 = dma.done [#allocation5], 384
    $region37: #{tpu_custom_call.1} parent=1 // pred_fallthru
      _
    %641 = vsyncpa [#allocation4], 1
    %642 = vsyncpa [#allocation9], 1
    %643 = vsyncpa [#allocation5], 1
    %644 = vsyncpa [#allocation6], 1

</llo_original>
